<compile_context>
chip_gen: v6e
topology: v6e:2x2x1
jax: 0.10.0
libtpu: 0.0.40
codegen_flags: <defaults>
</compile_context>

<pallas_src>
import math
import jax
import jax.numpy as jnp
from jax.experimental import pallas as pl
from jax.experimental.pallas import tpu as pltpu

REPEAT_T = 10  # hard-coded `.repeat(1, 10, 1, 1)` in the PyTorch forward


# ----------------------------------------------------------------------------
# Kernel
# ----------------------------------------------------------------------------
def _default_value_kernel(label_ref, v_ref, w_ref, b_ref, o_ref):
    # label_ref : (B,) int32 in SMEM (scalar prefetch; gather already applied
    #             by the index_map, so it is not read here)
    # v_ref     : (1, node_n, d_model)  == value[label[i]]
    # w_ref     : (d_model, 3)          == mlp.weight.T  (resident across grid)
    # b_ref     : (1, 3)                == mlp.bias
    # o_ref     : (1, REPEAT_T, node_n, 3)
    del label_ref
    x = v_ref[0]                                                   # (node_n, d_model), 2-D tile
    y = jnp.dot(x, w_ref[...], preferred_element_type=jnp.float32)  # MXU: (node_n, 3)
    y = y + b_ref[...]                                             # + (1, 3) broadcast
    y = y.astype(o_ref.dtype)
    # unsqueeze(1).repeat(1, 10, 1, 1): broadcast along the time axis on write
    o_ref[...] = jnp.broadcast_to(y[None, None], o_ref.shape)
    # TODO(synk): dropout/grad paths are out of scope; forward has none.


# ----------------------------------------------------------------------------
# Wrapper
# ----------------------------------------------------------------------------
def default_value_forward(src, label, value, w, b):
    """src: ignored (as in the PyTorch forward).
    label: (B,) int. value: (label_num, node_n, d_model).
    w: (d_model, 3) == mlp.weight.T.  b: (1, 3) == mlp.bias.
    Returns (B, REPEAT_T, node_n, 3)."""
    del src  # unused by the module's forward
    B = label.shape[0]
    _, node_n, d_model = value.shape
    out_shape = jax.ShapeDtypeStruct((B, REPEAT_T, node_n, 3), value.dtype)

    # index_maps receive the scalar-prefetch ref(s) as trailing positional args.
    v_spec = pl.BlockSpec((1, node_n, d_model), lambda i, lbl: (lbl[i], 0, 0))
    w_spec = pl.BlockSpec((d_model, 3), lambda i, lbl: (0, 0))
    b_spec = pl.BlockSpec((1, 3), lambda i, lbl: (0, 0))
    o_spec = pl.BlockSpec((1, REPEAT_T, node_n, 3), lambda i, lbl: (i, 0, 0, 0))

    return pl.pallas_call(
        _default_value_kernel,
        out_shape=out_shape,
        grid_spec=pltpu.PrefetchScalarGridSpec(
            num_scalar_prefetch=1,
            grid=(B,),
            in_specs=[v_spec, w_spec, b_spec],
            out_specs=o_spec,
        ),
        compiler_params=pltpu.CompilerParams(
            dimension_semantics=("parallel",),        # pipelining + v7x 2-TC split
            vmem_limit_bytes=48 * 1024 * 1024,        # headroom; fits v7x's 64 MiB
        ),
    )(label.astype(jnp.int32), value, w, b)


# ----------------------------------------------------------------------------
# Demo / self-check
# ----------------------------------------------------------------------------
if __name__ == "__main__":
    LABEL_NUM, NODE_N, D_MODEL = 4, 16, 32
    B = 8  # batch of labels -> 8 grid steps (pipelined, even 2-core split)

    key = jax.random.PRNGKey(0)
    kv, kw, kb, kl, ks = jax.random.split(key, 5)

    # reset_emb(): value ~ U(-1/sqrt(d_model), 1/sqrt(d_model))
    bound = 1.0 / math.sqrt(D_MODEL)
    value = jax.random.uniform(kv, (LABEL_NUM, NODE_N, D_MODEL), jnp.float32, -bound, bound)
    # nn.Linear(d_model, 3) params, stored transposed so y = x @ w + b
    w = jax.random.uniform(kw, (D_MODEL, 3), jnp.float32, -bound, bound)
    b = jax.random.uniform(kb, (1, 3), jnp.float32, -bound, bound)

    label = jax.random.randint(kl, (B,), 0, LABEL_NUM, dtype=jnp.int32)
    src = jax.random.normal(ks, (B, REPEAT_T, NODE_N, 3), jnp.float32)  # unused by forward

    out = default_value_forward(src, label, value, w, b)
    jax.block_until_ready(out)

    # Pure-JAX reference of the PyTorch forward.
    gathered = value[label]                                   # (B, node_n, d_model)
    ref = jnp.einsum("bnd,dk->bnk", gathered, w) + b[0]       # (B, node_n, 3)
    ref = jnp.broadcast_to(ref[:, None], (B, REPEAT_T, NODE_N, 3))

    assert out.shape == (B, REPEAT_T, NODE_N, 3)
    assert jnp.allclose(out, ref, atol=1e-5, rtol=1e-5)
    print("KERNEL_OK")
</pallas_src>

<mosaic_0001>
module attributes {stable_mosaic.version = 11 : i64} {
  func.func @_default_value_kernel(%arg0: i32, %arg1: memref<8xi32, #tpu.memory_space<smem>>, %arg2: memref<1x16x32xf32, #tpu.memory_space<vmem>>, %arg3: memref<32x3xf32, #tpu.memory_space<vmem>>, %arg4: memref<1x3xf32, #tpu.memory_space<vmem>>, %arg5: memref<1x10x16x3xf32, #tpu.memory_space<vmem>>) attributes {dimension_semantics = [#tpu.dimension_semantics<parallel>], iteration_bounds = array<i64: 8>, scalar_prefetch = 1 : i64, scratch_operands = 0 : i64, tpu.core_type = #tpu.core_type<tc>, window_params = [{transform_indices = @transform_0, window_bounds = array<i64: 1, 16, 32>}, {pipeline_mode = #tpu.pipeline_mode<synchronous>, transform_indices = @transform_1, window_bounds = array<i64: 32, 3>}, {pipeline_mode = #tpu.pipeline_mode<synchronous>, transform_indices = @transform_2, window_bounds = array<i64: 1, 3>}, {transform_indices = @transform_3, window_bounds = array<i64: 1, 10, 16, 3>}]} {
    %c0 = arith.constant 0 : index
    %c0_0 = arith.constant 0 : index
    %c0_1 = arith.constant 0 : index
    %0 = vector.load %arg2[%c0, %c0_0, %c0_1] : memref<1x16x32xf32, #tpu.memory_space<vmem>>, vector<1x16x32xf32>
    %1 = vector.shape_cast %0 : vector<1x16x32xf32> to vector<16x32xf32>
    %c0_2 = arith.constant 0 : index
    %c0_3 = arith.constant 0 : index
    %2 = vector.load %arg3[%c0_2, %c0_3] : memref<32x3xf32, #tpu.memory_space<vmem>>, vector<32x3xf32>
    %cst = arith.constant dense<0.000000e+00> : vector<16x3xf32>
    %3 = tpu.matmul %1, %2, %cst {dimension_numbers = #tpu.dot_dimension_numbers<[1], [0], [0], [1], [0, 0, 1, 1], [], []>} : vector<16x32xf32>, vector<32x3xf32>, vector<16x3xf32> -> vector<16x3xf32>
    %c0_4 = arith.constant 0 : index
    %c0_5 = arith.constant 0 : index
    %4 = vector.load %arg4[%c0_4, %c0_5] : memref<1x3xf32, #tpu.memory_space<vmem>>, vector<1x3xf32>
    %5 = vector.broadcast %4 : vector<1x3xf32> to vector<16x3xf32>
    %6 = arith.addf %3, %5 : vector<16x3xf32>
    %7 = vector.shape_cast %6 : vector<16x3xf32> to vector<1x1x16x3xf32>
    %8 = vector.shape_cast %7 : vector<1x1x16x3xf32> to vector<1x1x16x3xf32>
    %9 = vector.broadcast %8 : vector<1x1x16x3xf32> to vector<1x10x16x3xf32>
    %c0_6 = arith.constant 0 : index
    %c0_7 = arith.constant 0 : index
    %c0_8 = arith.constant 0 : index
    %c0_9 = arith.constant 0 : index
    %10 = vector.load %arg5[%c0_6, %c0_7, %c0_8, %c0_9] : memref<1x10x16x3xf32, #tpu.memory_space<vmem>>, vector<1x10x16x3xf32>
    tpu.vector_store %arg5[%c0_6, %c0_7, %c0_8, %c0_9], %9 {strides = array<i32>} : memref<1x10x16x3xf32, #tpu.memory_space<vmem>>, vector<1x10x16x3xf32>,
    return
  }
  func.func @transform_0(%arg0: i32, %arg1: memref<8xi32, #tpu.memory_space<smem>>) -> (i32, i32, i32) {
    %0 = arith.index_cast %arg0 : i32 to index
    %1 = memref.load %arg1[%0] : memref<8xi32, #tpu.memory_space<smem>>
    %c0_i32 = arith.constant 0 : i32
    %c0_i32_0 = arith.constant 0 : i32
    %c0_i32_1 = arith.constant 0 : i32
    return %1, %c0_i32, %c0_i32_0 : i32, i32, i32
  }
  func.func @transform_1(%arg0: i32, %arg1: memref<8xi32, #tpu.memory_space<smem>>) -> (i32, i32) {
    %c0_i32 = arith.constant 0 : i32
    %c0_i32_0 = arith.constant 0 : i32
    %c0_i32_1 = arith.constant 0 : i32
    return %c0_i32, %c0_i32_0 : i32, i32
  }
  func.func @transform_2(%arg0: i32, %arg1: memref<8xi32, #tpu.memory_space<smem>>) -> (i32, i32) {
    %c0_i32 = arith.constant 0 : i32
    %c0_i32_0 = arith.constant 0 : i32
    %c0_i32_1 = arith.constant 0 : i32
    return %c0_i32, %c0_i32_0 : i32, i32
  }
  func.func @transform_3(%arg0: i32, %arg1: memref<8xi32, #tpu.memory_space<smem>>) -> (i32, i32, i32, i32) {
    %c0_i32 = arith.constant 0 : i32
    %c0_i32_0 = arith.constant 0 : i32
    %c0_i32_1 = arith.constant 0 : i32
    %c0_i32_2 = arith.constant 0 : i32
    return %arg0, %c0_i32, %c0_i32_0, %c0_i32_1 : i32, i32, i32, i32
  }
}

</mosaic_0001>

<llo_original>
// kernel: tpu_custom_call.1
$region0: #{tpu_custom_call.1}
  #allocation0 [shape = 'u32[]', space=smem, size = 0x4, offset = 0x4, fixed_abs, tag = 'smem constant byte address 0x4 - core index']
  #allocation1 [shape = 'u32[144,128]{1,0:T(1,128)}', space=vmem, size = 0x12000, scoped, tag = 'internal scratch']
  #allocation2 [shape = 's32[1]{0}', space=sflag, size = 0x4, scoped, tag = 'scoped memory for tpu_custom_call.1']
  #allocation3 [shape = 'u8[512]{0}', space=smem, size = 0x200, scoped, tag = 'prefetched SMEM operand 0']
  %s0 = inlined_call_operand.vmem [shape: s32[8], index: 0, kind: input, shape index: {}]
  %s1 = inlined_call_operand.hbm [shape: f32[4,16,32], index: 1, kind: input, shape index: {}]
  %s2 = inlined_call_operand.vmem [shape: f32[32,3], index: 2, kind: input, shape index: {}]
  %s3 = inlined_call_operand.vmem [shape: f32[1,3], index: 3, kind: input, shape index: {}]
  %s4 = inlined_call_operand.vmem [shape: f32[8,10,16,3], index: 4, kind: output, shape index: {}]
  %s5 = sld [smem:[#allocation0]]
  $region49: #{tpu_custom_call.1} parent=0
    _
  %s7 = ssub.s32 1, %s5
  %s8 = scalar_select 0, %s7, %s5
  %s9 = sshll.u32 %s0, 4
  %s10 = int_to_ptr.vmem [resolvable:$true] %s9
  %12 = dma.vmem_to_smem %s10, 16, [#allocation3], [#allocation2]
  %13 = dma.done [#allocation2], 16
  %14 = sfence
  $region1: #{tpu_custom_call.1} parent=0
    #allocation4 [shape = 'u8[16384]{0}', space=vmem, size = 0x4000, scoped, tag = 'input window, operand 1']
    #allocation5 [shape = 's32[2]{0}', space=sflag, size = 0x8, scoped, tag = 'scoped memory for tpu_custom_call.1']
    %15 = vsyncpa [#allocation5], 0
    %s16 = scalar_lea.sflag [#allocation5], 1
    %17 = vsyncpa %s16, 0
    loop: start=0, step=1, limit=10
    $region2: #{tpu_custom_call.1} parent=1 // loop_pre_header
      _
    $region3: #{tpu_custom_call.1} parent=1 // loop_header
      %s19 = sphi 0, %s23
      %p20 = scmp.ge.s32.totalorder %s19, 10
      %s31 = sphi 0, %s33
      %s34 = sphi 0, %s31
      %s35 = sphi 0, %s34
      %s51 = sphi 0, %s35
      %s55 = sphi 0, %s55
      %s57 = sphi 0, %s55
      %s58 = sphi 0, %s57
      %s72 = sphi 0, %s58
      %s76 = sphi 0, %s76
      %s78 = sphi 0, %s76
      %s79 = sphi 0, %s78
      %s93 = sphi 0, %s79
      %s99 = sphi 0, %s101
      %s102 = sphi 0, %s99
      %s103 = sphi 0, %s102
      %s119 = sphi 0, %s103
    $region4: #{tpu_custom_call.1} parent=1 // loop_header_branch
      %22 = sbr.rel (%p20) target = $region8
    $region5: #{tpu_custom_call.1} parent=1 // loop_body
      %s24 = ssub.s32 %s19, 1
      %s25 = ssub.s32 %s19, 2
      %s26 = sadd.s32 %s19, 1
      %s27 = sld [smem:[#allocation3 + %s19]]
      %s28 = sld [smem:[#allocation3 + %s26]]
      %s29 = ssub.s32 %s27, %s28
      %p30 = scmp.eq.s32.totalorder %s29, 0
      %s32 = sadd.s32 %s31, 1
      %s33 = scalar_select %p30, %s31, %s32
      %p36 = pneg %p30
      %p37 = scmp.eq.s32.totalorder %s19, 7
      %p38 = por %p36, %p37
      %p39 = scmp.ne.s32.totalorder %s31, %s34
      %p40 = scmp.eq.s32.totalorder %s19, 0
      %p41 = por %p39, %p40
      %p42 = scmp.ne.s32.totalorder %s31, %s34
      %p43 = scmp.eq.s32.totalorder %s24, 7
      %p44 = por %p42, %p43
      %p45 = scmp.ne.s32.totalorder %s34, %s35
      %p46 = scmp.eq.s32.totalorder %s24, 0
      %p47 = por %p45, %p46
      %p48 = scmp.ne.s32.totalorder %s34, %s35
      %p49 = scmp.eq.s32.totalorder %s25, 7
      %p50 = por %p48, %p49
      %p52 = scmp.ne.s32.totalorder %s35, %s51
      %p53 = scmp.eq.s32.totalorder %s25, 0
      %p54 = por %p52, %p53
      %s56 = sadd.s32 %s55, 1
      %p59 = scmp.eq.s32.totalorder %s19, 7
      %p60 = scmp.ne.s32.totalorder %s55, %s57
      %p61 = scmp.eq.s32.totalorder %s19, 0
      %p62 = por %p60, %p61
      %p63 = scmp.ne.s32.totalorder %s55, %s57
      %p64 = scmp.eq.s32.totalorder %s24, 7
      %p65 = por %p63, %p64
      %p66 = scmp.ne.s32.totalorder %s57, %s58
      %p67 = scmp.eq.s32.totalorder %s24, 0
      %p68 = por %p66, %p67
      %p69 = scmp.ne.s32.totalorder %s57, %s58
      %p70 = scmp.eq.s32.totalorder %s25, 7
      %p71 = por %p69, %p70
      %p73 = scmp.ne.s32.totalorder %s58, %s72
      %p74 = scmp.eq.s32.totalorder %s25, 0
      %p75 = por %p73, %p74
      %s77 = sadd.s32 %s76, 1
      %p80 = scmp.eq.s32.totalorder %s19, 7
      %p81 = scmp.ne.s32.totalorder %s76, %s78
      %p82 = scmp.eq.s32.totalorder %s19, 0
      %p83 = por %p81, %p82
      %p84 = scmp.ne.s32.totalorder %s76, %s78
      %p85 = scmp.eq.s32.totalorder %s24, 7
      %p86 = por %p84, %p85
      %p87 = scmp.ne.s32.totalorder %s78, %s79
      %p88 = scmp.eq.s32.totalorder %s24, 0
      %p89 = por %p87, %p88
      %p90 = scmp.ne.s32.totalorder %s78, %s79
      %p91 = scmp.eq.s32.totalorder %s25, 7
      %p92 = por %p90, %p91
      %p94 = scmp.ne.s32.totalorder %s79, %s93
      %p95 = scmp.eq.s32.totalorder %s25, 0
      %p96 = por %p94, %p95
      %s97 = ssub.s32 %s19, %s26
      %p98 = scmp.eq.s32.totalorder %s97, 0
      %s100 = sadd.s32 %s99, 1
      %s101 = scalar_select %p98, %s99, %s100
      %p104 = pneg %p98
      %p105 = scmp.eq.s32.totalorder %s19, 7
      %p106 = por %p104, %p105
      %p107 = scmp.ne.s32.totalorder %s99, %s102
      %p108 = scmp.eq.s32.totalorder %s19, 0
      %p109 = por %p107, %p108
      %p110 = scmp.ne.s32.totalorder %s99, %s102
      %p111 = scmp.eq.s32.totalorder %s24, 7
      %p112 = por %p110, %p111
      %p113 = scmp.ne.s32.totalorder %s102, %s103
      %p114 = scmp.eq.s32.totalorder %s24, 0
      %p115 = por %p113, %p114
      %p116 = scmp.ne.s32.totalorder %s102, %s103
      %p117 = scmp.eq.s32.totalorder %s25, 7
      %p118 = por %p116, %p117
      %p120 = scmp.ne.s32.totalorder %s103, %s119
      %p121 = scmp.eq.s32.totalorder %s25, 0
      %p122 = por %p120, %p121
      %p123 = scmp.le.s32.totalorder 1, %s19
      %p124 = scmp.lt.s32.totalorder %s19, 9
      %p125 = pnand %p123, %p124
      %p126 = pneg %p125
      // Predicated region
      $region9: #{tpu_custom_call.1} parent=5 // pred_check
        _
      $region10: #{tpu_custom_call.1} parent=5 // pred_check_branch
        %128 = sbr.rel (%p125) target = $region12
      $region11: #{tpu_custom_call.1} parent=5 // pred_region
        %s129 = ssub.s32 %s19, 1
        // Predicated region
        $region13: #{tpu_custom_call.1} parent=11 // pred_check
          %p130 = pneg %p68
        $region14: #{tpu_custom_call.1} parent=11 // pred_check_branch
          %132 = sbr.rel (%p130) target = $region16
        $region15: #{tpu_custom_call.1} parent=11 // pred_region
          _
        $region16: #{tpu_custom_call.1} parent=11 // pred_fallthru
          _
        // Predicated region
        $region17: #{tpu_custom_call.1} parent=11 // pred_check
          %p133 = pneg %p89
        $region18: #{tpu_custom_call.1} parent=11 // pred_check_branch
          %135 = sbr.rel (%p133) target = $region20
        $region19: #{tpu_custom_call.1} parent=11 // pred_region
          _
        $region20: #{tpu_custom_call.1} parent=11 // pred_fallthru
          _
      $region12: #{tpu_custom_call.1} parent=5 // pred_fallthru
        _
      %p136 = scmp.lt.s32.totalorder %s19, 8
      // Predicated region
      $region21: #{tpu_custom_call.1} parent=5 // pred_check
        %p137 = pneg %p136
      $region22: #{tpu_custom_call.1} parent=5 // pred_check_branch
        %139 = sbr.rel (%p137) target = $region24
      $region23: #{tpu_custom_call.1} parent=5 // pred_region
        // Predicated region
        $region25: #{tpu_custom_call.1} parent=23 // pred_check
          %p140 = pneg %p41
        $region26: #{tpu_custom_call.1} parent=23 // pred_check_branch
          %142 = sbr.rel (%p140) target = $region28
        $region27: #{tpu_custom_call.1} parent=23 // pred_region
          %s143 = sand.u32 %s31, 1
          %s144 = scalar_lea.sflag [#allocation5], %s143
          %s145 = sand.u32 %s31, 1
          %s146 = smul.addr %s145, 16
          %s147 = scalar_lea.vmem [#allocation4], %s146
          %s148 = sld [smem:[#allocation3 + %s19]]
          %s150 = ssub.s32 256, 256
          %151 = vsyncadd %s144, %s150
          %s152 = smul.addr %s148, 2
          %s153 = smul.addr %s152, 128
          %s154 = scalar_lea.hbm %s1, %s153
          %s155 = sshll.u32 %s147, 4
          %s156 = int_to_ptr.vmem [resolvable:$true] %s155
          %161 = dma.hbm_to_vmem [thread:$0]  %s154, 256, %s156, %s144, 128, 128, 8
        $region28: #{tpu_custom_call.1} parent=23 // pred_fallthru
          _
      $region24: #{tpu_custom_call.1} parent=5 // pred_fallthru
        _
      %p162 = scmp.le.s32.totalorder 1, %s19
      %p163 = scmp.lt.s32.totalorder %s19, 9
      %p164 = pnand %p162, %p163
      %p165 = pneg %p164
      // Predicated region
      $region29: #{tpu_custom_call.1} parent=5 // pred_check
        _
      $region30: #{tpu_custom_call.1} parent=5 // pred_check_branch
        %167 = sbr.rel (%p164) target = $region32
      $region31: #{tpu_custom_call.1} parent=5 // pred_region
        %s168 = ssub.s32 %s19, 1
        %s169 = sand.u32 %s34, 1
        %s170 = scalar_lea.sflag [#allocation5], %s169
        %s171 = sand.u32 %s34, 1
        %s172 = smul.addr %s171, 16
        %s173 = scalar_lea.vmem [#allocation4], %s172
        // Predicated region
        $region33: #{tpu_custom_call.1} parent=31 // pred_check
          %p174 = pneg %p47
        $region34: #{tpu_custom_call.1} parent=31 // pred_check_branch
          %176 = sbr.rel (%p174) target = $region36
        $region35: #{tpu_custom_call.1} parent=31 // pred_region
          %177 = dma.done %s170, 256
        $region36: #{tpu_custom_call.1} parent=31 // pred_fallthru
          _
        %s178 = sand.u32 %s34, 1
        %s179 = scalar_lea.sflag [#allocation5], %s178
        %s180 = sand.u32 %s34, 1
        %s181 = smul.addr %s180, 16
        %s182 = scalar_lea.vmem [#allocation4], %s181
        %p183 = pneg %p47
        %p184 = pneg %p44
        %p185 = pneg %p68
        %p186 = pneg %p65
        %p187 = pneg %p89
        %p188 = pneg %p86
        %p189 = pneg %p115
        %p190 = pneg %p112
        %p191 = scmp.lt.s32.totalorder %s24, 7
        %s192 = scalar_select %p191, %s24, 7
        %s193 = smul.addr %s192, 20
        %s194 = smul.addr %s193, 8
        %s195 = scalar_lea.vmem %s4, %s194
        %s196 = sld [smem:[#allocation3 + %s24]]
        %p197 = scmp.lt.s32.totalorder %s24, 7
        %s198 = scalar_select %p197, %s24, 7
        %s199 = smul.addr %s198, 20
        %s200 = smul.addr %s199, 8
        %s201 = scalar_lea.vmem %s4, %s200
        %v202 = vld [vmem:[%s173] sm:$0xff]
        %v203 = vld [vmem:[%s173 + $0x8] sm:$0xff]
        %v204 = vld [vmem:[%s2] sm:$0xff]
        %v205 = vld [vmem:[%s2 + $0x8] sm:$0xff]
        %v206 = vld [vmem:[%s2 + $0x10] sm:$0xff]
        %v207 = vld [vmem:[%s2 + $0x18] sm:$0xff]
        %v208 = vld [vmem:[%s3] sm:$0x1]
        %v210 = vlaneseq
        %v211 = vshrl.u32 %v210, 7
        %v212 = vsub.s32 0, %v211
        %v213 = vrot.slane %v208, %v212
        %vm215 = vcmask 261120
        %v217 = vsel %vm215, %v202, 0
        %v220 = vsel %vm215, %v203, 0
        %222 = vmatprep.subr.mxu0 0.0
        %223 = vmatpush1.msra.mxu0 0.0
        %224 = vmatprep.subr.mxu0 0.0
        %225 = vmatpush1.msra.mxu0 0.0
        %226 = vmatprep.subr.mxu0 0.0
        %227 = vmatpush1.msra.mxu0 0.0
        %228 = vmatprep.subr.mxu0 0.0
        %229 = vmatpush1.msra.mxu0 0.0
        %230 = vmatprep.subr.mxu0 0.0
        %231 = vmatpush1.msra.mxu0 0.0
        %232 = vmatprep.subr.mxu0 0.0
        %233 = vmatpush1.msra.mxu0 0.0
        %234 = vmatprep.subr.mxu0 0.0
        %235 = vmatpush1.msra.mxu0 0.0
        %236 = vmatprep.subr.mxu0 0.0
        %237 = vmatpush1.msra.mxu0 0.0
        %238 = vmatprep.subr.mxu0 0.0
        %239 = vmatpush1.msra.mxu0 0.0
        %240 = vmatprep.subr.mxu0 0.0
        %241 = vmatpush1.msra.mxu0 0.0
        %242 = vmatprep.subr.mxu0 0.0
        %243 = vmatpush1.msra.mxu0 0.0
        %244 = vmatprep.subr.mxu0 0.0
        %245 = vmatpush1.msra.mxu0 0.0
        %246 = vmatprep.subr.mxu0 0.0
        %247 = vmatpush1.msra.mxu0 %v207
        %248 = vmatprep.subr.mxu0 0.0
        %249 = vmatpush1.msra.mxu0 %v206
        %250 = vmatprep.subr.mxu0 0.0
        %251 = vmatpush1.msra.mxu0 %v205
        %252 = vmatprep.subr.mxu0 0.0
        %253 = vmatpush1.msra.mxu0 %v204
        %254 = vmatprep.subr.mxu0 0.0
        %255 = vmatpush2.msra.mxu0 0.0
        %256 = vmatprep.subr.mxu0 0.0
        %257 = vmatpush2.msra.mxu0 0.0
        %258 = vmatprep.subr.mxu0 0.0
        %259 = vmatpush2.msra.mxu0 0.0
        %260 = vmatprep.subr.mxu0 0.0
        %261 = vmatpush2.msra.mxu0 0.0
        %262 = vmatprep.subr.mxu0 0.0
        %263 = vmatpush2.msra.mxu0 0.0
        %264 = vmatprep.subr.mxu0 0.0
        %265 = vmatpush2.msra.mxu0 0.0
        %266 = vmatprep.subr.mxu0 0.0
        %267 = vmatpush2.msra.mxu0 0.0
        %268 = vmatprep.subr.mxu0 0.0
        %269 = vmatpush2.msra.mxu0 0.0
        %270 = vmatprep.subr.mxu0 0.0
        %271 = vmatpush2.msra.mxu0 0.0
        %272 = vmatprep.subr.mxu0 0.0
        %273 = vmatpush2.msra.mxu0 0.0
        %274 = vmatprep.subr.mxu0 0.0
        %275 = vmatpush2.msra.mxu0 0.0
        %276 = vmatprep.subr.mxu0 0.0
        %277 = vmatpush2.msra.mxu0 0.0
        %278 = vmatprep.subr.mxu0 0.0
        %279 = vmatpush2.msra.mxu0 0.0
        %280 = vmatprep.subr.mxu0 0.0
        %281 = vmatpush2.msra.mxu0 0.0
        %282 = vmatprep.subr.mxu0 0.0
        %283 = vmatpush2.msra.mxu0 0.0
        %284 = vmatprep.subr.mxu0 0.0
        %285 = vmatpush2.msra.mxu0 0.0
        %286 = vmatprep.mubr.f32.mxu0 0.0
        %287 = vmatmul.mubr.f32.gmra.mxu0 %v217
        %v288 = vpop.f32.mrf.mxu0
        %v289 = vadd.f32 %v213, %v288
        %v290 = vpop.f32.mrf.mxu0
        %291 = vmatprep.mubr.f32.mxu0 0.0
        %292 = vmatmul.mubr.f32.gmra.mxu0 %v220
        %v293 = vpop.f32.mrf.mxu0
        %v294 = vadd.f32 %v213, %v293
        %v295 = vpop.f32.mrf.mxu0
        %296 = vdwg.mxu0
        %vm297 = vcmask 23552
        %298 = vst.msk [vmem:[%s201] sm:$0xff] %vm297, %v289
        %299 = vst.msk [vmem:[%s201 + $0x8] sm:$0xff] %vm297, %v294
        %300 = vst.msk [vmem:[%s201 + $0x10] sm:$0xff] %vm297, %v289
        %301 = vst.msk [vmem:[%s201 + $0x18] sm:$0xff] %vm297, %v294
        %302 = vst.msk [vmem:[%s201 + $0x20] sm:$0xff] %vm297, %v289
        %303 = vst.msk [vmem:[%s201 + $0x28] sm:$0xff] %vm297, %v294
        %304 = vst.msk [vmem:[%s201 + $0x30] sm:$0xff] %vm297, %v289
        %305 = vst.msk [vmem:[%s201 + $0x38] sm:$0xff] %vm297, %v294
        %306 = vst.msk [vmem:[%s201 + $0x40] sm:$0xff] %vm297, %v289
        %307 = vst.msk [vmem:[%s201 + $0x48] sm:$0xff] %vm297, %v294
        %308 = vst.msk [vmem:[%s201 + $0x50] sm:$0xff] %vm297, %v289
        %309 = vst.msk [vmem:[%s201 + $0x58] sm:$0xff] %vm297, %v294
        %310 = vst.msk [vmem:[%s201 + $0x60] sm:$0xff] %vm297, %v289
        %311 = vst.msk [vmem:[%s201 + $0x68] sm:$0xff] %vm297, %v294
        %312 = vst.msk [vmem:[%s201 + $0x70] sm:$0xff] %vm297, %v289
        %313 = vst.msk [vmem:[%s201 + $0x78] sm:$0xff] %vm297, %v294
        %314 = vst.msk [vmem:[%s201 + $0x80] sm:$0xff] %vm297, %v289
        %315 = vst.msk [vmem:[%s201 + $0x88] sm:$0xff] %vm297, %v294
        %316 = vst.msk [vmem:[%s201 + $0x90] sm:$0xff] %vm297, %v289
        %317 = vst.msk [vmem:[%s201 + $0x98] sm:$0xff] %vm297, %v294
        %p318 = scmp.lt.s32.totalorder %s24, 7
        %s319 = scalar_select %p318, %s24, 7
        %s320 = smul.addr %s319, 20
        %s321 = smul.addr %s320, 8
        %s322 = scalar_lea.vmem %s4, %s321
        // Predicated region
        $region37: #{tpu_custom_call.1} parent=31 // pred_check
          %p323 = pneg %p112
        $region38: #{tpu_custom_call.1} parent=31 // pred_check_branch
          %325 = sbr.rel (%p323) target = $region40
        $region39: #{tpu_custom_call.1} parent=31 // pred_region
          _
        $region40: #{tpu_custom_call.1} parent=31 // pred_fallthru
          _
      $region32: #{tpu_custom_call.1} parent=5 // pred_fallthru
        _
      %p326 = scmp.le.s32.totalorder 2, %s19
      // Predicated region
      $region41: #{tpu_custom_call.1} parent=5 // pred_check
        %p327 = pneg %p326
      $region42: #{tpu_custom_call.1} parent=5 // pred_check_branch
        %329 = sbr.rel (%p327) target = $region44
      $region43: #{tpu_custom_call.1} parent=5 // pred_region
        %s330 = ssub.s32 %s19, 2
        // Predicated region
        $region45: #{tpu_custom_call.1} parent=43 // pred_check
          %p331 = pneg %p118
        $region46: #{tpu_custom_call.1} parent=43 // pred_check_branch
          %333 = sbr.rel (%p331) target = $region48
        $region47: #{tpu_custom_call.1} parent=43 // pred_region
          %p334 = scmp.lt.s32.totalorder %s25, 7
          %s335 = scalar_select %p334, %s25, 7
          %s336 = smul.addr %s335, 20
          %s337 = smul.addr %s336, 8
          %s338 = scalar_lea.vmem %s4, %s337
        $region48: #{tpu_custom_call.1} parent=43 // pred_fallthru
          _
      $region44: #{tpu_custom_call.1} parent=5 // pred_fallthru
        _
    $region6: #{tpu_custom_call.1} parent=1 // loop_footer
      %s23 = sadd.s32 1, %s19
    $region7: #{tpu_custom_call.1} parent=1 // loop_footer_branch
      %18 = sbr.rel target = $region3
    $region8: #{tpu_custom_call.1} parent=1 // loop_exit
      _
    %339 = vsyncpa [#allocation5], 1
    %s340 = scalar_lea.sflag [#allocation5], 1
    %341 = vsyncpa %s340, 1

</llo_original>
